<compile_context>
chip_gen: v7x
topology: tpu7x:2x2x1
jax: 0.10.0
libtpu: 0.0.40
codegen_flags: <defaults>
</compile_context>

<pallas_src>
import jax
import jax.numpy as jnp
import numpy as np
from jax.experimental import pallas as pl
from jax.experimental.pallas import tpu as pltpu

FPAD = 128  # lane-padded feature width; all real feature dims must be <= FPAD - 2


# ---------------------------------------------------------------------------
# Fused multi-layer kernel: one grid step == one GNN layer.
# ---------------------------------------------------------------------------
def fused_gnn_kernel(z0_ref, m_ref, esum_ref, w_ref, out_ref):
    l = pl.program_id(0)

    # Initialise the VMEM-resident carry (the output block) with the input features.
    @pl.when(l == 0)
    def _():
        out_ref[...] = z0_ref[...]

    # Current node features (+ constant-1 column in lane 127), cast once to bf16 so
    # every matmul below is a native single-pass bf16 MXU op (f32 accumulation).
    z_bf = out_ref[...].astype(jnp.bfloat16)                      # (Npad, FPAD)

    # Per-layer packed weights: [Wn; We; Wr_top; Wr_bot] stacked on the K axis.
    wn = w_ref[0, 0 * FPAD:1 * FPAD, :]
    we = w_ref[0, 1 * FPAD:2 * FPAD, :]
    wr_top = w_ref[0, 2 * FPAD:3 * FPAD, :]
    wr_bot = w_ref[0, 3 * FPAD:4 * FPAD, :]

    # node half of every message; bn rides on z's constant-1 column (Wn row 127).
    nh = jnp.dot(z_bf, wn, preferred_element_type=jnp.float32).astype(jnp.bfloat16)

    # mean over {local} + in-neighbours:  [inv * (A^T + I)] @ node_half
    # (the 1/(1+deg) mean scale is folded into the adjacency rows host-side).
    mean_u = jnp.dot(m_ref[...], nh, preferred_element_type=jnp.float32)

    # edge half: inv*(esum @ We + deg*be); lane 127 of edge_u carries an exact 1.0
    # used below to add br and regenerate z's constant-1 column for the next layer.
    edge_u = jnp.dot(esum_ref[...], we, preferred_element_type=jnp.float32)

    # reduce layer as two K=128 dots (no lane-axis concat / relayout copy).
    out_ref[...] = (
        jnp.dot(mean_u.astype(jnp.bfloat16), wr_top, preferred_element_type=jnp.float32)
        + jnp.dot(edge_u.astype(jnp.bfloat16), wr_bot, preferred_element_type=jnp.float32))


def gnn_forward_pallas(kernel_ops):
    z0, m, esum_aug, w_all = kernel_ops
    num_layers = w_all.shape[0]
    n_pad = z0.shape[0]

    # Explicit scoped-VMEM budget from the actually-resident blocks (+25% headroom).
    w_layer_bytes = 4 * FPAD * FPAD * 2                     # one layer's bf16 weights
    resident = (m.size * m.dtype.itemsize                   # single-buffered adjacency
                + z0.size * z0.dtype.itemsize               # single-buffered z0
                + esum_aug.size * esum_aug.dtype.itemsize   # single-buffered esum
                + 2 * w_layer_bytes                         # double-buffered weights
                + 2 * n_pad * FPAD * 4                      # f32 z carry (output block)
                + 8 * n_pad * FPAD * 4)                     # matmul temporaries headroom
    vmem_limit = int(min(64 * 2**20, max(16 * 2**20, int(1.25 * resident))))

    single = pl.Buffered(1)   # grid-invariant inputs: no point double-buffering

    return pl.pallas_call(
        fused_gnn_kernel,
        out_shape=jax.ShapeDtypeStruct((n_pad, FPAD), jnp.float32),
        grid=(num_layers,),
        in_specs=[
            pl.BlockSpec((n_pad, FPAD), lambda l: (0, 0),
                         pipeline_mode=single),                       # z0 (f32, once)
            pl.BlockSpec((n_pad, n_pad), lambda l: (0, 0),
                         pipeline_mode=single),                       # inv*(A^T+I), bf16
            pl.BlockSpec((n_pad, FPAD), lambda l: (0, 0),
                         pipeline_mode=single),                       # esum_aug, bf16
            pl.BlockSpec((1, 4 * FPAD, FPAD), lambda l: (l, 0, 0)),   # packed weights / layer
        ],
        out_specs=pl.BlockSpec((n_pad, FPAD), lambda l: (0, 0)),      # z carry / final out
        compiler_params=pltpu.CompilerParams(
            dimension_semantics=("arbitrary",),   # layer loop is sequential (carried z)
            vmem_limit_bytes=vmem_limit),
    )(z0, m, esum_aug, w_all)


# ---------------------------------------------------------------------------
# Parameters (unpadded, used by the reference) and kernel-operand packing.
# ---------------------------------------------------------------------------
def init_layer_params(key, in_node, in_edge, out_msg, out_reduce):
    h2 = out_msg // 2
    ks = jax.random.split(key, 7)
    scale = 0.1
    return {
        "wn": scale * jax.random.normal(ks[0], (in_node, h2), jnp.float32),
        "bn": scale * jax.random.normal(ks[1], (h2,), jnp.float32),
        "we": scale * jax.random.normal(ks[2], (in_edge, h2), jnp.float32),
        "be": scale * jax.random.normal(ks[3], (h2,), jnp.float32),
        # reduce_layer weight split into top (node half) / bottom (edge half)
        "wr_top": scale * jax.random.normal(ks[4], (h2, out_reduce), jnp.float32),
        "wr_bot": scale * jax.random.normal(ks[5], (h2, out_reduce), jnp.float32),
        "br": scale * jax.random.normal(ks[6], (out_reduce,), jnp.float32),
    }


def init_gnn_params(key, config):
    layers = []
    keys = jax.random.split(key, config["num_layers"])
    layers.append(init_layer_params(
        keys[0], config["in_features_node"], config["in_features_edge"],
        config["out_features_msg"], config["out_features_hidden"]))
    for i in range(config["num_layers"] - 2):
        layers.append(init_layer_params(
            keys[1 + i], config["out_features_hidden"], config["in_features_edge"],
            config["out_features_msg"], config["out_features_hidden"]))
    layers.append(init_layer_params(
        keys[-1], config["out_features_hidden"], config["in_features_edge"],
        config["out_features_msg"], config["out_features"]))
    return layers


def pack_kernel_operands(params, z0, a_t, esum, deg):
    """Host-side one-time prep: pad to 128 lanes, fold biases / identity / mean scale."""
    n, fn0 = z0.shape
    fe = esum.shape[1]
    n_pad = ((n + 127) // 128) * 128
    deg_col = jnp.reshape(deg, (n,))
    inv_col = 1.0 / (1.0 + deg_col)

    assert fn0 <= FPAD - 2 and fe <= FPAD - 2

    # inv * (A^T + I): folds the local "node_half" term AND the mean scale into the
    # aggregation matmul.  Stored bf16 (dominant VMEM/HBM consumer).
    m = (jnp.zeros((n_pad, n_pad), jnp.float32)
         .at[:n, :n].set(inv_col[:, None] * (a_t + jnp.eye(n, dtype=jnp.float32)))
         ).astype(jnp.bfloat16)

    # z0 with constant-1 column in lane FPAD-1 (carries bn through Wn). Kept f32 so
    # the f32 carry is initialised exactly.
    z0_pad = (jnp.zeros((n_pad, FPAD), jnp.float32)
              .at[:n, :fn0].set(z0)
              .at[:, FPAD - 1].set(1.0))

    # esum, pre-scaled by inv, augmented with:
    #   lane FPAD-2: exact constant 1.0  (= inv*(1+deg))  -> bias/const carrier
    #   lane FPAD-1: inv*deg                              -> carries deg*be*inv via We
    esum_aug = (jnp.zeros((n_pad, FPAD), jnp.float32)
                .at[:n, :fe].set(inv_col[:, None] * esum)
                .at[:, FPAD - 2].set(1.0)
                .at[:n, FPAD - 1].set(inv_col * deg_col)
                ).astype(jnp.bfloat16)

    # Single packed weight stack per layer: [Wn; We; Wr_top; Wr_bot] (4*FPAD, FPAD), bf16.
    w_all = []
    for p in params:
        fn, h2 = p["wn"].shape
        hr = p["wr_top"].shape[1]
        assert fn <= FPAD - 2 and h2 <= FPAD - 2 and hr <= FPAD - 2

        wn = (jnp.zeros((FPAD, FPAD), jnp.float32)
              .at[:fn, :h2].set(p["wn"])
              .at[FPAD - 1, :h2].set(p["bn"]))                 # bn via z's constant column
        we = (jnp.zeros((FPAD, FPAD), jnp.float32)
              .at[:fe, :h2].set(p["we"])
              .at[FPAD - 1, :h2].set(p["be"])                  # inv*deg*be via deg column
              .at[FPAD - 2, FPAD - 1].set(1.0))                # pass constant-1 carrier through
        wr_top = (jnp.zeros((FPAD, FPAD), jnp.float32)
                  .at[:h2, :hr].set(p["wr_top"]))
        wr_bot = (jnp.zeros((FPAD, FPAD), jnp.float32)
                  .at[:h2, :hr].set(p["wr_bot"])
                  .at[FPAD - 1, :hr].set(p["br"])              # br via constant-1 carrier
                  .at[FPAD - 1, FPAD - 1].set(1.0))            # regenerate constant-1 column
        w_all.append(jnp.concatenate([wn, we, wr_top, wr_bot], axis=0))

    w_all = jnp.stack(w_all).astype(jnp.bfloat16)
    return z0_pad, m, esum_aug, w_all


# ---------------------------------------------------------------------------
# Plain-JAX f32 reference with identical math (unpadded), for correctness checks.
# ---------------------------------------------------------------------------
def gnn_forward_ref(params, z, a_t, esum, deg):
    for p in params:
        inv = 1.0 / (1.0 + deg)
        node_half = z @ p["wn"] + p["bn"]
        agg_node = a_t @ node_half
        mean_node = (node_half + agg_node) * inv
        edge_half = (esum @ p["we"] + deg * p["be"]) * inv
        z = mean_node @ p["wr_top"] + edge_half @ p["wr_bot"] + p["br"]
    return z


if __name__ == "__main__":
    config = {
        "in_features_node": 16,
        "in_features_edge": 8,
        "out_features_msg": 64,
        "out_features_hidden": 32,
        "out_features": 16,
        "num_layers": 3,
        "aggregator_type": "mean",
    }
    N = 16

    key = jax.random.PRNGKey(0)
    k_adj, k_edge, k_node, k_param = jax.random.split(key, 4)

    # adjacency: ring (guarantees in-degree >= 1) plus random extra edges
    ring = jnp.zeros((N, N), jnp.float32).at[jnp.arange(N), (jnp.arange(N) + 1) % N].set(1.0)
    extra = (jax.random.uniform(k_adj, (N, N)) < 0.25).astype(jnp.float32)
    adj = jnp.clip(ring + extra, 0.0, 1.0)             # adj[u, v] = 1 iff edge u -> v

    # dense edge features, zeroed where no edge exists
    edge_feat = jax.random.normal(k_edge, (N, N, config["in_features_edge"]), jnp.float32)
    edge_feat = edge_feat * adj[..., None]

    # node features
    z0 = jax.random.normal(k_node, (N, config["in_features_node"]), jnp.float32)

    # precomputed graph tensors (plain-JAX glue)
    a_t = adj.T                                        # (N_dst, N_src)
    esum = edge_feat.sum(axis=0)                       # (N_dst, Fe): sum of in-edge features
    deg = adj.sum(axis=0).reshape(N, 1)                # in-degree per destination node

    params = init_gnn_params(k_param, config)

    kernel_ops = pack_kernel_operands(params, z0, a_t, esum, deg)
    out_pad = gnn_forward_pallas(kernel_ops)
    out_pad = jax.block_until_ready(out_pad)
    out = np.asarray(out_pad)[:N, :config["out_features"]]

    ref = np.asarray(gnn_forward_ref(params, z0, a_t, esum, deg))
    assert out.shape == (N, config["out_features"])
    # bf16 adjacency / esum / weights (f32 accumulation) -> loosened tolerances.
    np.testing.assert_allclose(out, ref, rtol=5e-2, atol=5e-3)

    print("KERNEL_OK")
</pallas_src>

<mosaic_0001>
module attributes {stable_mosaic.version = 11 : i64} {
  func.func @fused_gnn_kernel(%arg0: i32, %arg1: memref<128x128xf32, #tpu.memory_space<vmem>>, %arg2: memref<128x128xbf16, #tpu.memory_space<vmem>>, %arg3: memref<128x128xbf16, #tpu.memory_space<vmem>>, %arg4: memref<1x512x128xbf16, #tpu.memory_space<vmem>>, %arg5: memref<128x128xf32, #tpu.memory_space<vmem>>) attributes {dimension_semantics = [#tpu.dimension_semantics<arbitrary>], iteration_bounds = array<i64: 3>, scalar_prefetch = 0 : i64, scratch_operands = 0 : i64, tpu.core_type = #tpu.core_type<tc>, window_params = [{pipeline_mode = #tpu.pipeline_mode<synchronous>, transform_indices = @transform_0, window_bounds = array<i64: 128, 128>}, {pipeline_mode = #tpu.pipeline_mode<synchronous>, transform_indices = @transform_1, window_bounds = array<i64: 128, 128>}, {pipeline_mode = #tpu.pipeline_mode<synchronous>, transform_indices = @transform_2, window_bounds = array<i64: 128, 128>}, {transform_indices = @transform_3, window_bounds = array<i64: 1, 512, 128>}, {pipeline_mode = #tpu.pipeline_mode<synchronous>, transform_indices = @transform_4, window_bounds = array<i64: 128, 128>}]} {
    %c0_i32 = arith.constant 0 : i32
    %0 = arith.cmpi eq, %arg0, %c0_i32 : i32
    %1 = arith.extui %0 : i1 to i32
    %c0_i32_0 = arith.constant 0 : i32
    %2 = arith.cmpi ne, %1, %c0_i32_0 : i32
    scf.if %2 {
      %c0_21 = arith.constant 0 : index
      %c0_22 = arith.constant 0 : index
      %25 = vector.load %arg1[%c0_21, %c0_22] : memref<128x128xf32, #tpu.memory_space<vmem>>, vector<128x128xf32>
      %c0_23 = arith.constant 0 : index
      %c0_24 = arith.constant 0 : index
      %26 = vector.load %arg5[%c0_23, %c0_24] : memref<128x128xf32, #tpu.memory_space<vmem>>, vector<128x128xf32>
      tpu.vector_store %arg5[%c0_23, %c0_24], %25 {strides = array<i32>} : memref<128x128xf32, #tpu.memory_space<vmem>>, vector<128x128xf32>,
    } else {
    }
    %c0 = arith.constant 0 : index
    %c0_1 = arith.constant 0 : index
    %3 = vector.load %arg5[%c0, %c0_1] : memref<128x128xf32, #tpu.memory_space<vmem>>, vector<128x128xf32>
    %4 = arith.truncf %3 : vector<128x128xf32> to vector<128x128xbf16>
    %c0_2 = arith.constant 0 : index
    %c0_3 = arith.constant 0 : index
    %c0_4 = arith.constant 0 : index
    %5 = vector.load %arg4[%c0_2, %c0_3, %c0_4] : memref<1x512x128xbf16, #tpu.memory_space<vmem>>, vector<1x128x128xbf16>
    %6 = vector.shape_cast %5 : vector<1x128x128xbf16> to vector<128x128xbf16>
    %c0_5 = arith.constant 0 : index
    %c128 = arith.constant 128 : index
    %c0_6 = arith.constant 0 : index
    %7 = vector.load %arg4[%c0_5, %c128, %c0_6] : memref<1x512x128xbf16, #tpu.memory_space<vmem>>, vector<1x128x128xbf16>
    %8 = vector.shape_cast %7 : vector<1x128x128xbf16> to vector<128x128xbf16>
    %c0_7 = arith.constant 0 : index
    %c256 = arith.constant 256 : index
    %c0_8 = arith.constant 0 : index
    %9 = vector.load %arg4[%c0_7, %c256, %c0_8] : memref<1x512x128xbf16, #tpu.memory_space<vmem>>, vector<1x128x128xbf16>
    %10 = vector.shape_cast %9 : vector<1x128x128xbf16> to vector<128x128xbf16>
    %c0_9 = arith.constant 0 : index
    %c384 = arith.constant 384 : index
    %c0_10 = arith.constant 0 : index
    %11 = vector.load %arg4[%c0_9, %c384, %c0_10] : memref<1x512x128xbf16, #tpu.memory_space<vmem>>, vector<1x128x128xbf16>
    %12 = vector.shape_cast %11 : vector<1x128x128xbf16> to vector<128x128xbf16>
    %cst = arith.constant dense<0.000000e+00> : vector<128x128xf32>
    %13 = tpu.matmul %4, %6, %cst {dimension_numbers = #tpu.dot_dimension_numbers<[1], [0], [0], [1], [0, 0, 1, 1], [], []>} : vector<128x128xbf16>, vector<128x128xbf16>, vector<128x128xf32> -> vector<128x128xf32>
    %14 = arith.truncf %13 : vector<128x128xf32> to vector<128x128xbf16>
    %c0_11 = arith.constant 0 : index
    %c0_12 = arith.constant 0 : index
    %15 = vector.load %arg2[%c0_11, %c0_12] : memref<128x128xbf16, #tpu.memory_space<vmem>>, vector<128x128xbf16>
    %cst_13 = arith.constant dense<0.000000e+00> : vector<128x128xf32>
    %16 = tpu.matmul %15, %14, %cst_13 {dimension_numbers = #tpu.dot_dimension_numbers<[1], [0], [0], [1], [0, 0, 1, 1], [], []>} : vector<128x128xbf16>, vector<128x128xbf16>, vector<128x128xf32> -> vector<128x128xf32>
    %c0_14 = arith.constant 0 : index
    %c0_15 = arith.constant 0 : index
    %17 = vector.load %arg3[%c0_14, %c0_15] : memref<128x128xbf16, #tpu.memory_space<vmem>>, vector<128x128xbf16>
    %cst_16 = arith.constant dense<0.000000e+00> : vector<128x128xf32>
    %18 = tpu.matmul %17, %8, %cst_16 {dimension_numbers = #tpu.dot_dimension_numbers<[1], [0], [0], [1], [0, 0, 1, 1], [], []>} : vector<128x128xbf16>, vector<128x128xbf16>, vector<128x128xf32> -> vector<128x128xf32>
    %19 = arith.truncf %16 : vector<128x128xf32> to vector<128x128xbf16>
    %cst_17 = arith.constant dense<0.000000e+00> : vector<128x128xf32>
    %20 = tpu.matmul %19, %10, %cst_17 {dimension_numbers = #tpu.dot_dimension_numbers<[1], [0], [0], [1], [0, 0, 1, 1], [], []>} : vector<128x128xbf16>, vector<128x128xbf16>, vector<128x128xf32> -> vector<128x128xf32>
    %21 = arith.truncf %18 : vector<128x128xf32> to vector<128x128xbf16>
    %cst_18 = arith.constant dense<0.000000e+00> : vector<128x128xf32>
    %22 = tpu.matmul %21, %12, %cst_18 {dimension_numbers = #tpu.dot_dimension_numbers<[1], [0], [0], [1], [0, 0, 1, 1], [], []>} : vector<128x128xbf16>, vector<128x128xbf16>, vector<128x128xf32> -> vector<128x128xf32>
    %23 = arith.addf %20, %22 : vector<128x128xf32>
    %c0_19 = arith.constant 0 : index
    %c0_20 = arith.constant 0 : index
    %24 = vector.load %arg5[%c0_19, %c0_20] : memref<128x128xf32, #tpu.memory_space<vmem>>, vector<128x128xf32>
    tpu.vector_store %arg5[%c0_19, %c0_20], %23 {strides = array<i32>} : memref<128x128xf32, #tpu.memory_space<vmem>>, vector<128x128xf32>,
    return
  }
  func.func @transform_0(%arg0: i32) -> (i32, i32) {
    %c0_i32 = arith.constant 0 : i32
    %c0_i32_0 = arith.constant 0 : i32
    %c0_i32_1 = arith.constant 0 : i32
    return %c0_i32, %c0_i32_0 : i32, i32
  }
  func.func @transform_1(%arg0: i32) -> (i32, i32) {
    %c0_i32 = arith.constant 0 : i32
    %c0_i32_0 = arith.constant 0 : i32
    %c0_i32_1 = arith.constant 0 : i32
    return %c0_i32, %c0_i32_0 : i32, i32
  }
  func.func @transform_2(%arg0: i32) -> (i32, i32) {
    %c0_i32 = arith.constant 0 : i32
    %c0_i32_0 = arith.constant 0 : i32
    %c0_i32_1 = arith.constant 0 : i32
    return %c0_i32, %c0_i32_0 : i32, i32
  }
  func.func @transform_3(%arg0: i32) -> (i32, i32, i32) {
    %c0_i32 = arith.constant 0 : i32
    %c0_i32_0 = arith.constant 0 : i32
    %c0_i32_1 = arith.constant 0 : i32
    return %arg0, %c0_i32, %c0_i32_0 : i32, i32, i32
  }
  func.func @transform_4(%arg0: i32) -> (i32, i32) {
    %c0_i32 = arith.constant 0 : i32
    %c0_i32_0 = arith.constant 0 : i32
    %c0_i32_1 = arith.constant 0 : i32
    return %c0_i32, %c0_i32_0 : i32, i32
  }
}

</mosaic_0001>

<llo_original>
// kernel: tpu_custom_call.1
$region0: #{tpu_custom_call.1}
  #allocation0 [shape = 'u32[]', space=smem, size = 0x4, offset = 0x4, fixed_abs, tag = 'smem constant byte address 0x4 - core index']
  #allocation1 [shape = 'u32[144,128]{1,0:T(1,128)}', space=vmem, size = 0x12000, scoped, tag = 'internal scratch']
  %s0 = inlined_call_operand.hbm [shape: f32[128,128], index: 0, kind: input, shape index: {}]
  %s1 = inlined_call_operand.hbm [shape: bf16[128,128], index: 1, kind: input, shape index: {}]
  %s2 = inlined_call_operand.hbm [shape: bf16[128,128], index: 2, kind: input, shape index: {}]
  %s3 = inlined_call_operand.hbm [shape: bf16[3,512,128], index: 3, kind: input, shape index: {}]
  %s4 = inlined_call_operand.hbm [shape: f32[128,128], index: 4, kind: output, shape index: {}]
  %s5 = sld [smem:[#allocation0]]
  $region69: #{tpu_custom_call.1} parent=0
    _
  %s7 = ssub.s32 1, %s5
  %s8 = scalar_select 0, %s7, %s5
  $region1: #{tpu_custom_call.1} parent=0
    #allocation2 [shape = 'u8[65536]{0}', space=vmem, size = 0x10000, scoped, tag = 'input window, operand 0, single buffered']
    #allocation3 [shape = 's32[2]{0}', space=sflag, size = 0x8, scoped, tag = 'scoped memory for tpu_custom_call.1']
    #allocation4 [shape = 's32[2]{0}', space=sflag, size = 0x8, scoped, tag = 'scoped memory for tpu_custom_call.1']
    #allocation5 [shape = 'u8[32768]{0}', space=vmem, size = 0x8000, scoped, tag = 'input window, operand 1, single buffered']
    #allocation6 [shape = 's32[1]{0}', space=sflag, size = 0x4, scoped, tag = 'scoped memory for tpu_custom_call.1']
    #allocation7 [shape = 'u8[32768]{0}', space=vmem, size = 0x8000, scoped, tag = 'input window, operand 2, single buffered']
    #allocation8 [shape = 'u8[262144]{0}', space=vmem, size = 0x40000, scoped, tag = 'input window, operand 3']
    #allocation9 [shape = 's32[2]{0}', space=sflag, size = 0x8, scoped, tag = 'scoped memory for tpu_custom_call.1']
    #allocation10 [shape = 'u8[65536]{0}', space=vmem, size = 0x10000, scoped, tag = 'output window, operand 0, single buffered']
    %9 = vsyncpa [#allocation3], 0
    %10 = vsyncpa [#allocation6], 0
    %11 = vsyncpa [#allocation9], 0
    %s12 = scalar_lea.sflag [#allocation9], 1
    %13 = vsyncpa %s12, 0
    %14 = vsyncpa [#allocation4], 0
    loop: start=0, step=1, limit=5
    $region2: #{tpu_custom_call.1} parent=1 // loop_pre_header
      _
    $region3: #{tpu_custom_call.1} parent=1 // loop_header
      %s16 = sphi 0, %s20
      %p17 = scmp.ge.s32.totalorder %s16, 5
      %s24 = sphi 0, %s24
      %s26 = sphi 0, %s24
      %s27 = sphi 0, %s26
      %s41 = sphi 0, %s27
      %s45 = sphi 0, %s45
      %s47 = sphi 0, %s45
      %s48 = sphi 0, %s47
      %s62 = sphi 0, %s48
      %s66 = sphi 0, %s66
      %s68 = sphi 0, %s66
      %s69 = sphi 0, %s68
      %s83 = sphi 0, %s69
      %s89 = sphi 0, %s91
      %s92 = sphi 0, %s89
      %s93 = sphi 0, %s92
      %s109 = sphi 0, %s93
      %s113 = sphi 0, %s113
      %s115 = sphi 0, %s113
      %s116 = sphi 0, %s115
      %s130 = sphi 0, %s116
    $region4: #{tpu_custom_call.1} parent=1 // loop_header_branch
      %19 = sbr.rel (%p17) target = $region8
    $region5: #{tpu_custom_call.1} parent=1 // loop_body
      %s21 = ssub.s32 %s16, 1
      %s22 = ssub.s32 %s16, 2
      %s23 = sadd.s32 %s16, 1
      %s25 = sadd.s32 %s24, 1
      %p28 = scmp.eq.s32.totalorder %s16, 2
      %p29 = scmp.ne.s32.totalorder %s24, %s26
      %p30 = scmp.eq.s32.totalorder %s16, 0
      %p31 = por %p29, %p30
      %p32 = scmp.ne.s32.totalorder %s24, %s26
      %p33 = scmp.eq.s32.totalorder %s21, 2
      %p34 = por %p32, %p33
      %p35 = scmp.ne.s32.totalorder %s26, %s27
      %p36 = scmp.eq.s32.totalorder %s21, 0
      %p37 = por %p35, %p36
      %p38 = scmp.ne.s32.totalorder %s26, %s27
      %p39 = scmp.eq.s32.totalorder %s22, 2
      %p40 = por %p38, %p39
      %p42 = scmp.ne.s32.totalorder %s27, %s41
      %p43 = scmp.eq.s32.totalorder %s22, 0
      %p44 = por %p42, %p43
      %s46 = sadd.s32 %s45, 1
      %p49 = scmp.eq.s32.totalorder %s16, 2
      %p50 = scmp.ne.s32.totalorder %s45, %s47
      %p51 = scmp.eq.s32.totalorder %s16, 0
      %p52 = por %p50, %p51
      %p53 = scmp.ne.s32.totalorder %s45, %s47
      %p54 = scmp.eq.s32.totalorder %s21, 2
      %p55 = por %p53, %p54
      %p56 = scmp.ne.s32.totalorder %s47, %s48
      %p57 = scmp.eq.s32.totalorder %s21, 0
      %p58 = por %p56, %p57
      %p59 = scmp.ne.s32.totalorder %s47, %s48
      %p60 = scmp.eq.s32.totalorder %s22, 2
      %p61 = por %p59, %p60
      %p63 = scmp.ne.s32.totalorder %s48, %s62
      %p64 = scmp.eq.s32.totalorder %s22, 0
      %p65 = por %p63, %p64
      %s67 = sadd.s32 %s66, 1
      %p70 = scmp.eq.s32.totalorder %s16, 2
      %p71 = scmp.ne.s32.totalorder %s66, %s68
      %p72 = scmp.eq.s32.totalorder %s16, 0
      %p73 = por %p71, %p72
      %p74 = scmp.ne.s32.totalorder %s66, %s68
      %p75 = scmp.eq.s32.totalorder %s21, 2
      %p76 = por %p74, %p75
      %p77 = scmp.ne.s32.totalorder %s68, %s69
      %p78 = scmp.eq.s32.totalorder %s21, 0
      %p79 = por %p77, %p78
      %p80 = scmp.ne.s32.totalorder %s68, %s69
      %p81 = scmp.eq.s32.totalorder %s22, 2
      %p82 = por %p80, %p81
      %p84 = scmp.ne.s32.totalorder %s69, %s83
      %p85 = scmp.eq.s32.totalorder %s22, 0
      %p86 = por %p84, %p85
      %s87 = ssub.s32 %s16, %s23
      %p88 = scmp.eq.s32.totalorder %s87, 0
      %s90 = sadd.s32 %s89, 1
      %s91 = scalar_select %p88, %s89, %s90
      %p94 = pneg %p88
      %p95 = scmp.eq.s32.totalorder %s16, 2
      %p96 = por %p94, %p95
      %p97 = scmp.ne.s32.totalorder %s89, %s92
      %p98 = scmp.eq.s32.totalorder %s16, 0
      %p99 = por %p97, %p98
      %p100 = scmp.ne.s32.totalorder %s89, %s92
      %p101 = scmp.eq.s32.totalorder %s21, 2
      %p102 = por %p100, %p101
      %p103 = scmp.ne.s32.totalorder %s92, %s93
      %p104 = scmp.eq.s32.totalorder %s21, 0
      %p105 = por %p103, %p104
      %p106 = scmp.ne.s32.totalorder %s92, %s93
      %p107 = scmp.eq.s32.totalorder %s22, 2
      %p108 = por %p106, %p107
      %p110 = scmp.ne.s32.totalorder %s93, %s109
      %p111 = scmp.eq.s32.totalorder %s22, 0
      %p112 = por %p110, %p111
      %s114 = sadd.s32 %s113, 1
      %p117 = scmp.eq.s32.totalorder %s16, 2
      %p118 = scmp.ne.s32.totalorder %s113, %s115
      %p119 = scmp.eq.s32.totalorder %s16, 0
      %p120 = por %p118, %p119
      %p121 = scmp.ne.s32.totalorder %s113, %s115
      %p122 = scmp.eq.s32.totalorder %s21, 2
      %p123 = por %p121, %p122
      %p124 = scmp.ne.s32.totalorder %s115, %s116
      %p125 = scmp.eq.s32.totalorder %s21, 0
      %p126 = por %p124, %p125
      %p127 = scmp.ne.s32.totalorder %s115, %s116
      %p128 = scmp.eq.s32.totalorder %s22, 2
      %p129 = por %p127, %p128
      %p131 = scmp.ne.s32.totalorder %s116, %s130
      %p132 = scmp.eq.s32.totalorder %s22, 0
      %p133 = por %p131, %p132
      %p134 = scmp.le.s32.totalorder 1, %s16
      %p135 = scmp.lt.s32.totalorder %s16, 4
      %p136 = pnand %p134, %p135
      %p137 = pneg %p136
      // Predicated region
      $region9: #{tpu_custom_call.1} parent=5 // pred_check
        _
      $region10: #{tpu_custom_call.1} parent=5 // pred_check_branch
        %139 = sbr.rel (%p136) target = $region12
      $region11: #{tpu_custom_call.1} parent=5 // pred_region
        %s140 = ssub.s32 %s16, 1
        // Predicated region
        $region13: #{tpu_custom_call.1} parent=11 // pred_check
          %p141 = pneg %p37
        $region14: #{tpu_custom_call.1} parent=11 // pred_check_branch
          %143 = sbr.rel (%p141) target = $region16
        $region15: #{tpu_custom_call.1} parent=11 // pred_region
          %s145 = ssub.s32 2048, 2048
          %146 = vsyncadd [#allocation3], %s145
          %s147 = sshll.u32 [#allocation2], 4
          %s148 = int_to_ptr.vmem [resolvable:$true] %s147
          %153 = dma.hbm_to_vmem [thread:$0]  %s0, 2048, %s148, [#allocation3], 128, 128, 8
        $region16: #{tpu_custom_call.1} parent=11 // pred_fallthru
          _
        // Predicated region
        $region17: #{tpu_custom_call.1} parent=11 // pred_check
          %p154 = pneg %p58
        $region18: #{tpu_custom_call.1} parent=11 // pred_check_branch
          %156 = sbr.rel (%p154) target = $region20
        $region19: #{tpu_custom_call.1} parent=11 // pred_region
          %s158 = ssub.s32 1024, 1024
          %159 = vsyncadd [#allocation6], %s158
          %s160 = sshll.u32 [#allocation5], 4
          %s161 = int_to_ptr.vmem [resolvable:$true] %s160
          %166 = dma.hbm_to_vmem [thread:$0]  %s1, 1024, %s161, [#allocation6], 64, 64, 4
        $region20: #{tpu_custom_call.1} parent=11 // pred_fallthru
          _
        // Predicated region
        $region21: #{tpu_custom_call.1} parent=11 // pred_check
          %p167 = pneg %p79
        $region22: #{tpu_custom_call.1} parent=11 // pred_check_branch
          %169 = sbr.rel (%p167) target = $region24
        $region23: #{tpu_custom_call.1} parent=11 // pred_region
          %s171 = ssub.s32 1024, 1024
          %172 = vsyncadd [#allocation6], %s171
          %s173 = sshll.u32 [#allocation7], 4
          %s174 = int_to_ptr.vmem [resolvable:$true] %s173
          %179 = dma.hbm_to_vmem [thread:$0]  %s2, 1024, %s174, [#allocation6], 64, 64, 4
        $region24: #{tpu_custom_call.1} parent=11 // pred_fallthru
          _
      $region12: #{tpu_custom_call.1} parent=5 // pred_fallthru
        _
      %p180 = scmp.lt.s32.totalorder %s16, 3
      // Predicated region
      $region25: #{tpu_custom_call.1} parent=5 // pred_check
        %p181 = pneg %p180
      $region26: #{tpu_custom_call.1} parent=5 // pred_check_branch
        %183 = sbr.rel (%p181) target = $region28
      $region27: #{tpu_custom_call.1} parent=5 // pred_region
        // Predicated region
        $region29: #{tpu_custom_call.1} parent=27 // pred_check
          %p184 = pneg %p99
        $region30: #{tpu_custom_call.1} parent=27 // pred_check_branch
          %186 = sbr.rel (%p184) target = $region32
        $region31: #{tpu_custom_call.1} parent=27 // pred_region
          %s187 = sand.u32 %s89, 1
          %s188 = scalar_lea.sflag [#allocation9], %s187
          %s189 = sand.u32 %s89, 1
          %s190 = smul.addr %s189, 256
          %s191 = scalar_lea.vmem [#allocation8], %s190
          %s193 = ssub.s32 4096, 4096
          %194 = vsyncadd %s188, %s193
          %s195 = smul.addr %s16, 64
          %s196 = smul.addr %s195, 64
          %s197 = scalar_lea.hbm %s3, %s196
          %s198 = sshll.u32 %s191, 4
          %s199 = int_to_ptr.vmem [resolvable:$true] %s198
          %204 = dma.hbm_to_vmem [thread:$0]  %s197, 4096, %s199, %s188, 64, 64, 4
        $region32: #{tpu_custom_call.1} parent=27 // pred_fallthru
          _
      $region28: #{tpu_custom_call.1} parent=5 // pred_fallthru
        _
      %p205 = scmp.le.s32.totalorder 1, %s16
      %p206 = scmp.lt.s32.totalorder %s16, 4
      %p207 = pnand %p205, %p206
      %p208 = pneg %p207
      // Predicated region
      $region33: #{tpu_custom_call.1} parent=5 // pred_check
        _
      $region34: #{tpu_custom_call.1} parent=5 // pred_check_branch
        %210 = sbr.rel (%p207) target = $region36
      $region35: #{tpu_custom_call.1} parent=5 // pred_region
        %s211 = ssub.s32 %s16, 1
        // Predicated region
        $region37: #{tpu_custom_call.1} parent=35 // pred_check
          %p212 = pneg %p37
        $region38: #{tpu_custom_call.1} parent=35 // pred_check_branch
          %214 = sbr.rel (%p212) target = $region40
        $region39: #{tpu_custom_call.1} parent=35 // pred_region
          %215 = dma.done [#allocation3], 2048
        $region40: #{tpu_custom_call.1} parent=35 // pred_fallthru
          _
        // Predicated region
        $region41: #{tpu_custom_call.1} parent=35 // pred_check
          %p216 = pneg %p58
        $region42: #{tpu_custom_call.1} parent=35 // pred_check_branch
          %218 = sbr.rel (%p216) target = $region44
        $region43: #{tpu_custom_call.1} parent=35 // pred_region
          %219 = dma.done [#allocation6], 1024
        $region44: #{tpu_custom_call.1} parent=35 // pred_fallthru
          _
        // Predicated region
        $region45: #{tpu_custom_call.1} parent=35 // pred_check
          %p220 = pneg %p79
        $region46: #{tpu_custom_call.1} parent=35 // pred_check_branch
          %222 = sbr.rel (%p220) target = $region48
        $region47: #{tpu_custom_call.1} parent=35 // pred_region
          %223 = dma.done [#allocation6], 1024
        $region48: #{tpu_custom_call.1} parent=35 // pred_fallthru
          _
        %s224 = sand.u32 %s92, 1
        %s225 = scalar_lea.sflag [#allocation9], %s224
        %s226 = sand.u32 %s92, 1
        %s227 = smul.addr %s226, 256
        %s228 = scalar_lea.vmem [#allocation8], %s227
        // Predicated region
        $region49: #{tpu_custom_call.1} parent=35 // pred_check
          %p229 = pneg %p105
        $region50: #{tpu_custom_call.1} parent=35 // pred_check_branch
          %231 = sbr.rel (%p229) target = $region52
        $region51: #{tpu_custom_call.1} parent=35 // pred_region
          %232 = dma.done %s225, 4096
        $region52: #{tpu_custom_call.1} parent=35 // pred_fallthru
          _
        %p233 = pneg %p37
        %p234 = pneg %p34
        %p235 = pneg %p58
        %p236 = pneg %p55
        %p237 = pneg %p79
        %p238 = pneg %p76
        %s239 = sand.u32 %s92, 1
        %s240 = scalar_lea.sflag [#allocation9], %s239
        %s241 = sand.u32 %s92, 1
        %s242 = smul.addr %s241, 256
        %s243 = scalar_lea.vmem [#allocation8], %s242
        %p244 = pneg %p105
        %p245 = pneg %p102
        %p246 = pneg %p126
        %p247 = pneg %p123
        %p249 = scmp.eq.s32.totalorder %s21, 0
        // Predicated region
        $region53: #{tpu_custom_call.1} parent=35 // pred_check
          %p250 = pneg %p249
        $region54: #{tpu_custom_call.1} parent=35 // pred_check_branch
          %252 = sbr.rel (%p250) target = $region56
        $region55: #{tpu_custom_call.1} parent=35 // pred_region
          %v253 = vld [vmem:[#allocation2] sm:$0xff]
          %v254 = vld [vmem:[#allocation2 + $0x8] sm:$0xff]
          %v255 = vld [vmem:[#allocation2 + $0x10] sm:$0xff]
          %v256 = vld [vmem:[#allocation2 + $0x18] sm:$0xff]
          %v257 = vld [vmem:[#allocation2 + $0x20] sm:$0xff]
          %v258 = vld [vmem:[#allocation2 + $0x28] sm:$0xff]
          %v259 = vld [vmem:[#allocation2 + $0x30] sm:$0xff]
          %v260 = vld [vmem:[#allocation2 + $0x38] sm:$0xff]
          %v261 = vld [vmem:[#allocation2 + $0x40] sm:$0xff]
          %v262 = vld [vmem:[#allocation2 + $0x48] sm:$0xff]
          %v263 = vld [vmem:[#allocation2 + $0x50] sm:$0xff]
          %v264 = vld [vmem:[#allocation2 + $0x58] sm:$0xff]
          %v265 = vld [vmem:[#allocation2 + $0x60] sm:$0xff]
          %v266 = vld [vmem:[#allocation2 + $0x68] sm:$0xff]
          %v267 = vld [vmem:[#allocation2 + $0x70] sm:$0xff]
          %v268 = vld [vmem:[#allocation2 + $0x78] sm:$0xff]
          %269 = vst [vmem:[#allocation10] sm:$0xff] %v253
          %270 = vst [vmem:[#allocation10 + $0x8] sm:$0xff] %v254
          %271 = vst [vmem:[#allocation10 + $0x10] sm:$0xff] %v255
          %272 = vst [vmem:[#allocation10 + $0x18] sm:$0xff] %v256
          %273 = vst [vmem:[#allocation10 + $0x20] sm:$0xff] %v257
          %274 = vst [vmem:[#allocation10 + $0x28] sm:$0xff] %v258
          %275 = vst [vmem:[#allocation10 + $0x30] sm:$0xff] %v259
          %276 = vst [vmem:[#allocation10 + $0x38] sm:$0xff] %v260
          %277 = vst [vmem:[#allocation10 + $0x40] sm:$0xff] %v261
          %278 = vst [vmem:[#allocation10 + $0x48] sm:$0xff] %v262
          %279 = vst [vmem:[#allocation10 + $0x50] sm:$0xff] %v263
          %280 = vst [vmem:[#allocation10 + $0x58] sm:$0xff] %v264
          %281 = vst [vmem:[#allocation10 + $0x60] sm:$0xff] %v265
          %282 = vst [vmem:[#allocation10 + $0x68] sm:$0xff] %v266
          %283 = vst [vmem:[#allocation10 + $0x70] sm:$0xff] %v267
          %284 = vst [vmem:[#allocation10 + $0x78] sm:$0xff] %v268
        $region56: #{tpu_custom_call.1} parent=35 // pred_fallthru
          _
        %v285 = vld [vmem:[#allocation10] sm:$0xff]
        %v286 = vld [vmem:[#allocation10 + $0x8] sm:$0xff]
        %v287 = vld [vmem:[#allocation10 + $0x10] sm:$0xff]
        %v288 = vld [vmem:[#allocation10 + $0x18] sm:$0xff]
        %v289 = vld [vmem:[#allocation10 + $0x20] sm:$0xff]
        %v290 = vld [vmem:[#allocation10 + $0x28] sm:$0xff]
        %v291 = vld [vmem:[#allocation10 + $0x30] sm:$0xff]
        %v292 = vld [vmem:[#allocation10 + $0x38] sm:$0xff]
        %v293 = vld [vmem:[#allocation10 + $0x40] sm:$0xff]
        %v294 = vld [vmem:[#allocation10 + $0x48] sm:$0xff]
        %v295 = vld [vmem:[#allocation10 + $0x50] sm:$0xff]
        %v296 = vld [vmem:[#allocation10 + $0x58] sm:$0xff]
        %v297 = vld [vmem:[#allocation10 + $0x60] sm:$0xff]
        %v298 = vld [vmem:[#allocation10 + $0x68] sm:$0xff]
        %v299 = vld [vmem:[#allocation10 + $0x70] sm:$0xff]
        %v300 = vld [vmem:[#allocation10 + $0x78] sm:$0xff]
        %v301 = vpack.c.bf16 %v286, %v285
        %v302 = vpack.c.bf16 %v288, %v287
        %v303 = vpack.c.bf16 %v290, %v289
        %v304 = vpack.c.bf16 %v292, %v291
        %v305 = vpack.c.bf16 %v294, %v293
        %v306 = vpack.c.bf16 %v296, %v295
        %v307 = vpack.c.bf16 %v298, %v297
        %v308 = vpack.c.bf16 %v300, %v299
        %v309 = vld [vmem:[%s228] sm:$0xf]
        %v310 = vld [vmem:[%s228 + $0x4] sm:$0xf]
        %v311 = vld [vmem:[%s228 + $0x8] sm:$0xf]
        %v312 = vld [vmem:[%s228 + $0xc] sm:$0xf]
        %v313 = vld [vmem:[%s228 + $0x10] sm:$0xf]
        %v314 = vld [vmem:[%s228 + $0x14] sm:$0xf]
        %v315 = vld [vmem:[%s228 + $0x18] sm:$0xf]
        %v316 = vld [vmem:[%s228 + $0x1c] sm:$0xf]
        %v317 = vld [vmem:[%s228 + $0x20] sm:$0xf]
        %v318 = vld [vmem:[%s228 + $0x24] sm:$0xf]
        %v319 = vld [vmem:[%s228 + $0x28] sm:$0xf]
        %v320 = vld [vmem:[%s228 + $0x2c] sm:$0xf]
        %v321 = vld [vmem:[%s228 + $0x30] sm:$0xf]
        %v322 = vld [vmem:[%s228 + $0x34] sm:$0xf]
        %v323 = vld [vmem:[%s228 + $0x38] sm:$0xf]
        %v324 = vld [vmem:[%s228 + $0x3c] sm:$0xf]
        %v325 = vld [vmem:[%s228 + $0x40] sm:$0xf]
        %v326 = vld [vmem:[%s228 + $0x44] sm:$0xf]
        %v327 = vld [vmem:[%s228 + $0x48] sm:$0xf]
        %v328 = vld [vmem:[%s228 + $0x4c] sm:$0xf]
        %v329 = vld [vmem:[%s228 + $0x50] sm:$0xf]
        %v330 = vld [vmem:[%s228 + $0x54] sm:$0xf]
        %v331 = vld [vmem:[%s228 + $0x58] sm:$0xf]
        %v332 = vld [vmem:[%s228 + $0x5c] sm:$0xf]
        %v333 = vld [vmem:[%s228 + $0x60] sm:$0xf]
        %v334 = vld [vmem:[%s228 + $0x64] sm:$0xf]
        %v335 = vld [vmem:[%s228 + $0x68] sm:$0xf]
        %v336 = vld [vmem:[%s228 + $0x6c] sm:$0xf]
        %v337 = vld [vmem:[%s228 + $0x70] sm:$0xf]
        %v338 = vld [vmem:[%s228 + $0x74] sm:$0xf]
        %v339 = vld [vmem:[%s228 + $0x78] sm:$0xf]
        %v340 = vld [vmem:[%s228 + $0x7c] sm:$0xf]
        %v341 = vld [vmem:[%s228 + $0x80] sm:$0xf]
        %v342 = vld [vmem:[%s228 + $0x84] sm:$0xf]
        %v343 = vld [vmem:[%s228 + $0x88] sm:$0xf]
        %v344 = vld [vmem:[%s228 + $0x8c] sm:$0xf]
        %v345 = vld [vmem:[%s228 + $0x90] sm:$0xf]
        %v346 = vld [vmem:[%s228 + $0x94] sm:$0xf]
        %v347 = vld [vmem:[%s228 + $0x98] sm:$0xf]
        %v348 = vld [vmem:[%s228 + $0x9c] sm:$0xf]
        %v349 = vld [vmem:[%s228 + $0xa0] sm:$0xf]
        %v350 = vld [vmem:[%s228 + $0xa4] sm:$0xf]
        %v351 = vld [vmem:[%s228 + $0xa8] sm:$0xf]
        %v352 = vld [vmem:[%s228 + $0xac] sm:$0xf]
        %v353 = vld [vmem:[%s228 + $0xb0] sm:$0xf]
        %v354 = vld [vmem:[%s228 + $0xb4] sm:$0xf]
        %v355 = vld [vmem:[%s228 + $0xb8] sm:$0xf]
        %v356 = vld [vmem:[%s228 + $0xbc] sm:$0xf]
        %v357 = vld [vmem:[%s228 + $0xc0] sm:$0xf]
        %v358 = vld [vmem:[%s228 + $0xc4] sm:$0xf]
        %v359 = vld [vmem:[%s228 + $0xc8] sm:$0xf]
        %v360 = vld [vmem:[%s228 + $0xcc] sm:$0xf]
        %v361 = vld [vmem:[%s228 + $0xd0] sm:$0xf]
        %v362 = vld [vmem:[%s228 + $0xd4] sm:$0xf]
        %v363 = vld [vmem:[%s228 + $0xd8] sm:$0xf]
        %v364 = vld [vmem:[%s228 + $0xdc] sm:$0xf]
        %v365 = vld [vmem:[%s228 + $0xe0] sm:$0xf]
        %v366 = vld [vmem:[%s228 + $0xe4] sm:$0xf]
        %v367 = vld [vmem:[%s228 + $0xe8] sm:$0xf]
        %v368 = vld [vmem:[%s228 + $0xec] sm:$0xf]
        %v369 = vld [vmem:[%s228 + $0xf0] sm:$0xf]
        %v370 = vld [vmem:[%s228 + $0xf4] sm:$0xf]
        %v371 = vld [vmem:[%s228 + $0xf8] sm:$0xf]
        %v372 = vld [vmem:[%s228 + $0xfc] sm:$0xf]
        %v389 = vunpack.c.l.b16 %v309
        %v390 = vunpack.c.l.b16 %v310
        %v391 = vunpack.c.l.b16 %v311
        %v392 = vunpack.c.l.b16 %v312
        %v393 = vunpack.c.l.b16 %v313
        %v394 = vunpack.c.l.b16 %v314
        %v395 = vunpack.c.l.b16 %v315
        %v396 = vunpack.c.l.b16 %v316
        %v397 = vunpack.c.l.b16 %v317
        %v398 = vunpack.c.l.b16 %v318
        %v399 = vunpack.c.l.b16 %v319
        %v400 = vunpack.c.l.b16 %v320
        %v401 = vunpack.c.l.b16 %v321
        %v402 = vunpack.c.l.b16 %v322
        %v403 = vunpack.c.l.b16 %v323
        %v404 = vunpack.c.l.b16 %v324
        %v405 = vpack.c.b16 %v390, %v389
        %v406 = vpack.c.b16 %v392, %v391
        %v407 = vpack.c.b16 %v394, %v393
        %v408 = vpack.c.b16 %v396, %v395
        %v409 = vpack.c.b16 %v398, %v397
        %v410 = vpack.c.b16 %v400, %v399
        %v411 = vpack.c.b16 %v402, %v401
        %v412 = vpack.c.b16 %v404, %v403
        %421 = vmatprep.subr.bf16.mxu0 0
        %422 = vmatpush1.bf16.msra.mxu0 %v405
        %423 = vmatprep.subr.bf16.mxu0 0
        %424 = vmatpush1.bf16.msra.mxu0 %v406
        %425 = vmatprep.subr.bf16.mxu0 0
        %426 = vmatpush1.bf16.msra.mxu0 %v407
        %427 = vmatprep.subr.bf16.mxu0 0
        %428 = vmatpush1.bf16.msra.mxu0 %v408
        %429 = vmatprep.subr.bf16.mxu0 0
        %430 = vmatpush1.bf16.msra.mxu0 %v409
        %431 = vmatprep.subr.bf16.mxu0 0
        %432 = vmatpush1.bf16.msra.mxu0 %v410
        %433 = vmatprep.subr.bf16.mxu0 0
        %434 = vmatpush1.bf16.msra.mxu0 %v411
        %435 = vmatprep.subr.bf16.mxu0 0
        %436 = vmatpush1.bf16.msra.mxu0 %v412
        %437 = vmatprep.subr.bf16.mxu0 0
        %438 = vmatpush1.bf16.msra.mxu0 0
        %439 = vmatprep.subr.bf16.mxu0 0
        %440 = vmatpush1.bf16.msra.mxu0 0
        %441 = vmatprep.subr.bf16.mxu0 0
        %442 = vmatpush1.bf16.msra.mxu0 0
        %443 = vmatprep.subr.bf16.mxu0 0
        %444 = vmatpush1.bf16.msra.mxu0 0
        %445 = vmatprep.subr.bf16.mxu0 0
        %446 = vmatpush1.bf16.msra.mxu0 0
        %447 = vmatprep.subr.bf16.mxu0 0
        %448 = vmatpush1.bf16.msra.mxu0 0
        %449 = vmatprep.subr.bf16.mxu0 0
        %450 = vmatpush1.bf16.msra.mxu0 0
        %451 = vmatprep.subr.bf16.mxu0 0
        %452 = vmatpush1.bf16.msra.mxu0 0
        %453 = vmatprep.mubr.bf16.mxu0 0
        %454 = vmatmul.mubr.bf16.gmra.mrb[0].mxu0 %v301
        %v455 = vpop.f32.mrb[0].mxu0
        %v456 = vadd.f32 0.0, %v455
        %v457 = vpop.f32.mrb[0].mxu0
        %v458 = vpop.f32.mrb[0].mxu0
        %v459 = vadd.f32 0.0, %v458
        %v460 = vpop.f32.mrb[0].mxu0
        %461 = vmatprep.mubr.bf16.mxu0 0
        %462 = vmatmul.mubr.bf16.gmra.mrb[0].mxu0 %v302
        %v463 = vpop.f32.mrb[0].mxu0
        %v464 = vadd.f32 0.0, %v463
        %v465 = vpop.f32.mrb[0].mxu0
        %v466 = vpop.f32.mrb[0].mxu0
        %v467 = vadd.f32 0.0, %v466
        %v468 = vpop.f32.mrb[0].mxu0
        %469 = vmatprep.mubr.bf16.mxu0 0
        %470 = vmatmul.mubr.bf16.gmra.mrb[0].mxu0 %v303
        %v471 = vpop.f32.mrb[0].mxu0
        %v472 = vadd.f32 0.0, %v471
        %v473 = vpop.f32.mrb[0].mxu0
        %v474 = vpop.f32.mrb[0].mxu0
        %v475 = vadd.f32 0.0, %v474
        %v476 = vpop.f32.mrb[0].mxu0
        %477 = vmatprep.mubr.bf16.mxu0 0
        %478 = vmatmul.mubr.bf16.gmra.mrb[0].mxu0 %v304
        %v479 = vpop.f32.mrb[0].mxu0
        %v480 = vadd.f32 0.0, %v479
        %v481 = vpop.f32.mrb[0].mxu0
        %v482 = vpop.f32.mrb[0].mxu0
        %v483 = vadd.f32 0.0, %v482
        %v484 = vpop.f32.mrb[0].mxu0
        %485 = vmatprep.mubr.bf16.mxu0 0
        %486 = vmatmul.mubr.bf16.gmra.mrb[0].mxu0 %v305
        %v487 = vpop.f32.mrb[0].mxu0
        %v488 = vadd.f32 0.0, %v487
        %v489 = vpop.f32.mrb[0].mxu0
        %v490 = vpop.f32.mrb[0].mxu0
        %v491 = vadd.f32 0.0, %v490
        %v492 = vpop.f32.mrb[0].mxu0
        %493 = vmatprep.mubr.bf16.mxu0 0
        %494 = vmatmul.mubr.bf16.gmra.mrb[0].mxu0 %v306
        %v495 = vpop.f32.mrb[0].mxu0
        %v496 = vadd.f32 0.0, %v495
        %v497 = vpop.f32.mrb[0].mxu0
        %v498 = vpop.f32.mrb[0].mxu0
        %v499 = vadd.f32 0.0, %v498
        %v500 = vpop.f32.mrb[0].mxu0
        %501 = vmatprep.mubr.bf16.mxu0 0
        %502 = vmatmul.mubr.bf16.gmra.mrb[0].mxu0 %v307
        %v503 = vpop.f32.mrb[0].mxu0
        %v504 = vadd.f32 0.0, %v503
        %v505 = vpop.f32.mrb[0].mxu0
        %v506 = vpop.f32.mrb[0].mxu0
        %v507 = vadd.f32 0.0, %v506
        %v508 = vpop.f32.mrb[0].mxu0
        %509 = vmatprep.mubr.bf16.mxu0 0
        %510 = vmatmul.mubr.bf16.gmra.mrb[0].mxu0 %v308
        %v511 = vpop.f32.mrb[0].mxu0
        %v512 = vadd.f32 0.0, %v511
        %v513 = vpop.f32.mrb[0].mxu0
        %v514 = vpop.f32.mrb[0].mxu0
        %v515 = vadd.f32 0.0, %v514
        %v516 = vpop.f32.mrb[0].mxu0
        %517 = vdwg.mxu0
        %v518 = vpack.c.bf16 %v459, %v456
        %v519 = vpack.c.bf16 %v467, %v464
        %v520 = vpack.c.bf16 %v475, %v472
        %v521 = vpack.c.bf16 %v483, %v480
        %v522 = vpack.c.bf16 %v491, %v488
        %v523 = vpack.c.bf16 %v499, %v496
        %v524 = vpack.c.bf16 %v507, %v504
        %v525 = vpack.c.bf16 %v515, %v512
        %v526 = vld [vmem:[#allocation5] sm:$0xf]
        %v527 = vld [vmem:[#allocation5 + $0x4] sm:$0xf]
        %v528 = vld [vmem:[#allocation5 + $0x8] sm:$0xf]
        %v529 = vld [vmem:[#allocation5 + $0xc] sm:$0xf]
        %v530 = vld [vmem:[#allocation5 + $0x10] sm:$0xf]
        %v531 = vld [vmem:[#allocation5 + $0x14] sm:$0xf]
        %v532 = vld [vmem:[#allocation5 + $0x18] sm:$0xf]
        %v533 = vld [vmem:[#allocation5 + $0x1c] sm:$0xf]
        %v534 = vld [vmem:[#allocation5 + $0x20] sm:$0xf]
        %v535 = vld [vmem:[#allocation5 + $0x24] sm:$0xf]
        %v536 = vld [vmem:[#allocation5 + $0x28] sm:$0xf]
        %v537 = vld [vmem:[#allocation5 + $0x2c] sm:$0xf]
        %v538 = vld [vmem:[#allocation5 + $0x30] sm:$0xf]
        %v539 = vld [vmem:[#allocation5 + $0x34] sm:$0xf]
        %v540 = vld [vmem:[#allocation5 + $0x38] sm:$0xf]
        %v541 = vld [vmem:[#allocation5 + $0x3c] sm:$0xf]
        %v558 = vunpack.c.l.b16 %v526
        %v559 = vunpack.c.l.b16 %v527
        %v560 = vunpack.c.l.b16 %v528
        %v561 = vunpack.c.l.b16 %v529
        %v562 = vunpack.c.l.b16 %v530
        %v563 = vunpack.c.l.b16 %v531
        %v564 = vunpack.c.l.b16 %v532
        %v565 = vunpack.c.l.b16 %v533
        %v566 = vunpack.c.l.b16 %v534
        %v567 = vunpack.c.l.b16 %v535
        %v568 = vunpack.c.l.b16 %v536
        %v569 = vunpack.c.l.b16 %v537
        %v570 = vunpack.c.l.b16 %v538
        %v571 = vunpack.c.l.b16 %v539
        %v572 = vunpack.c.l.b16 %v540
        %v573 = vunpack.c.l.b16 %v541
        %v574 = vpack.c.b16 %v559, %v558
        %v575 = vpack.c.b16 %v561, %v560
        %v576 = vpack.c.b16 %v563, %v562
        %v577 = vpack.c.b16 %v565, %v564
        %v578 = vpack.c.b16 %v567, %v566
        %v579 = vpack.c.b16 %v569, %v568
        %v580 = vpack.c.b16 %v571, %v570
        %v581 = vpack.c.b16 %v573, %v572
        %590 = vmatprep.subr.bf16.mxu0 0
        %591 = vmatpush1.bf16.msra.mxu0 %v518
        %592 = vmatprep.subr.bf16.mxu0 0
        %593 = vmatpush1.bf16.msra.mxu0 %v519
        %594 = vmatprep.subr.bf16.mxu0 0
        %595 = vmatpush1.bf16.msra.mxu0 %v520
        %596 = vmatprep.subr.bf16.mxu0 0
        %597 = vmatpush1.bf16.msra.mxu0 %v521
        %598 = vmatprep.subr.bf16.mxu0 0
        %599 = vmatpush1.bf16.msra.mxu0 %v522
        %600 = vmatprep.subr.bf16.mxu0 0
        %601 = vmatpush1.bf16.msra.mxu0 %v523
        %602 = vmatprep.subr.bf16.mxu0 0
        %603 = vmatpush1.bf16.msra.mxu0 %v524
        %604 = vmatprep.subr.bf16.mxu0 0
        %605 = vmatpush1.bf16.msra.mxu0 %v525
        %606 = vmatprep.subr.bf16.mxu0 0
        %607 = vmatpush1.bf16.msra.mxu0 0
        %608 = vmatprep.subr.bf16.mxu0 0
        %609 = vmatpush1.bf16.msra.mxu0 0
        %610 = vmatprep.subr.bf16.mxu0 0
        %611 = vmatpush1.bf16.msra.mxu0 0
        %612 = vmatprep.subr.bf16.mxu0 0
        %613 = vmatpush1.bf16.msra.mxu0 0
        %614 = vmatprep.subr.bf16.mxu0 0
        %615 = vmatpush1.bf16.msra.mxu0 0
        %616 = vmatprep.subr.bf16.mxu0 0
        %617 = vmatpush1.bf16.msra.mxu0 0
        %618 = vmatprep.subr.bf16.mxu0 0
        %619 = vmatpush1.bf16.msra.mxu0 0
        %620 = vmatprep.subr.bf16.mxu0 0
        %621 = vmatpush1.bf16.msra.mxu0 0
        %622 = vmatprep.mubr.bf16.mxu0 0
        %623 = vmatmul.mubr.bf16.gmra.mrb[0].mxu0 %v574
        %v624 = vpop.f32.mrb[0].mxu0
        %v625 = vadd.f32 0.0, %v624
        %v626 = vpop.f32.mrb[0].mxu0
        %v627 = vpop.f32.mrb[0].mxu0
        %v628 = vadd.f32 0.0, %v627
        %v629 = vpop.f32.mrb[0].mxu0
        %630 = vmatprep.mubr.bf16.mxu0 0
        %631 = vmatmul.mubr.bf16.gmra.mrb[0].mxu0 %v575
        %v632 = vpop.f32.mrb[0].mxu0
        %v633 = vadd.f32 0.0, %v632
        %v634 = vpop.f32.mrb[0].mxu0
        %v635 = vpop.f32.mrb[0].mxu0
        %v636 = vadd.f32 0.0, %v635
        %v637 = vpop.f32.mrb[0].mxu0
        %638 = vmatprep.mubr.bf16.mxu0 0
        %639 = vmatmul.mubr.bf16.gmra.mrb[0].mxu0 %v576
        %v640 = vpop.f32.mrb[0].mxu0
        %v641 = vadd.f32 0.0, %v640
        %v642 = vpop.f32.mrb[0].mxu0
        %v643 = vpop.f32.mrb[0].mxu0
        %v644 = vadd.f32 0.0, %v643
        %v645 = vpop.f32.mrb[0].mxu0
        %646 = vmatprep.mubr.bf16.mxu0 0
        %647 = vmatmul.mubr.bf16.gmra.mrb[0].mxu0 %v577
        %v648 = vpop.f32.mrb[0].mxu0
        %v649 = vadd.f32 0.0, %v648
        %v650 = vpop.f32.mrb[0].mxu0
        %v651 = vpop.f32.mrb[0].mxu0
        %v652 = vadd.f32 0.0, %v651
        %v653 = vpop.f32.mrb[0].mxu0
        %654 = vmatprep.mubr.bf16.mxu0 0
        %655 = vmatmul.mubr.bf16.gmra.mrb[0].mxu0 %v578
        %v656 = vpop.f32.mrb[0].mxu0
        %v657 = vadd.f32 0.0, %v656
        %v658 = vpop.f32.mrb[0].mxu0
        %v659 = vpop.f32.mrb[0].mxu0
        %v660 = vadd.f32 0.0, %v659
        %v661 = vpop.f32.mrb[0].mxu0
        %662 = vmatprep.mubr.bf16.mxu0 0
        %663 = vmatmul.mubr.bf16.gmra.mrb[0].mxu0 %v579
        %v664 = vpop.f32.mrb[0].mxu0
        %v665 = vadd.f32 0.0, %v664
        %v666 = vpop.f32.mrb[0].mxu0
        %v667 = vpop.f32.mrb[0].mxu0
        %v668 = vadd.f32 0.0, %v667
        %v669 = vpop.f32.mrb[0].mxu0
        %670 = vmatprep.mubr.bf16.mxu0 0
        %671 = vmatmul.mubr.bf16.gmra.mrb[0].mxu0 %v580
        %v672 = vpop.f32.mrb[0].mxu0
        %v673 = vadd.f32 0.0, %v672
        %v674 = vpop.f32.mrb[0].mxu0
        %v675 = vpop.f32.mrb[0].mxu0
        %v676 = vadd.f32 0.0, %v675
        %v677 = vpop.f32.mrb[0].mxu0
        %678 = vmatprep.mubr.bf16.mxu0 0
        %679 = vmatmul.mubr.bf16.gmra.mrb[0].mxu0 %v581
        %v680 = vpop.f32.mrb[0].mxu0
        %v681 = vadd.f32 0.0, %v680
        %v682 = vpop.f32.mrb[0].mxu0
        %v683 = vpop.f32.mrb[0].mxu0
        %v684 = vadd.f32 0.0, %v683
        %v685 = vpop.f32.mrb[0].mxu0
        %686 = vdwg.mxu0
        %v687 = vld [vmem:[#allocation7] sm:$0xf]
        %v688 = vld [vmem:[#allocation7 + $0x4] sm:$0xf]
        %v689 = vld [vmem:[#allocation7 + $0x8] sm:$0xf]
        %v690 = vld [vmem:[#allocation7 + $0xc] sm:$0xf]
        %v691 = vld [vmem:[#allocation7 + $0x10] sm:$0xf]
        %v692 = vld [vmem:[#allocation7 + $0x14] sm:$0xf]
        %v693 = vld [vmem:[#allocation7 + $0x18] sm:$0xf]
        %v694 = vld [vmem:[#allocation7 + $0x1c] sm:$0xf]
        %v695 = vld [vmem:[#allocation7 + $0x20] sm:$0xf]
        %v696 = vld [vmem:[#allocation7 + $0x24] sm:$0xf]
        %v697 = vld [vmem:[#allocation7 + $0x28] sm:$0xf]
        %v698 = vld [vmem:[#allocation7 + $0x2c] sm:$0xf]
        %v699 = vld [vmem:[#allocation7 + $0x30] sm:$0xf]
        %v700 = vld [vmem:[#allocation7 + $0x34] sm:$0xf]
        %v701 = vld [vmem:[#allocation7 + $0x38] sm:$0xf]
        %v702 = vld [vmem:[#allocation7 + $0x3c] sm:$0xf]
        %v719 = vunpack.c.l.b16 %v687
        %v720 = vunpack.c.l.b16 %v688
        %v721 = vunpack.c.l.b16 %v689
        %v722 = vunpack.c.l.b16 %v690
        %v723 = vunpack.c.l.b16 %v691
        %v724 = vunpack.c.l.b16 %v692
        %v725 = vunpack.c.l.b16 %v693
        %v726 = vunpack.c.l.b16 %v694
        %v727 = vunpack.c.l.b16 %v695
        %v728 = vunpack.c.l.b16 %v696
        %v729 = vunpack.c.l.b16 %v697
        %v730 = vunpack.c.l.b16 %v698
        %v731 = vunpack.c.l.b16 %v699
        %v732 = vunpack.c.l.b16 %v700
        %v733 = vunpack.c.l.b16 %v701
        %v734 = vunpack.c.l.b16 %v702
        %v735 = vpack.c.b16 %v720, %v719
        %v736 = vpack.c.b16 %v722, %v721
        %v737 = vpack.c.b16 %v724, %v723
        %v738 = vpack.c.b16 %v726, %v725
        %v739 = vpack.c.b16 %v728, %v727
        %v740 = vpack.c.b16 %v730, %v729
        %v741 = vpack.c.b16 %v732, %v731
        %v742 = vpack.c.b16 %v734, %v733
        %v767 = vunpack.c.l.b16 %v325
        %v768 = vunpack.c.l.b16 %v326
        %v769 = vunpack.c.l.b16 %v327
        %v770 = vunpack.c.l.b16 %v328
        %v771 = vunpack.c.l.b16 %v329
        %v772 = vunpack.c.l.b16 %v330
        %v773 = vunpack.c.l.b16 %v331
        %v774 = vunpack.c.l.b16 %v332
        %v775 = vunpack.c.l.b16 %v333
        %v776 = vunpack.c.l.b16 %v334
        %v777 = vunpack.c.l.b16 %v335
        %v778 = vunpack.c.l.b16 %v336
        %v779 = vunpack.c.l.b16 %v337
        %v780 = vunpack.c.l.b16 %v338
        %v781 = vunpack.c.l.b16 %v339
        %v782 = vunpack.c.l.b16 %v340
        %v783 = vpack.c.b16 %v768, %v767
        %v784 = vpack.c.b16 %v770, %v769
        %v785 = vpack.c.b16 %v772, %v771
        %v786 = vpack.c.b16 %v774, %v773
        %v787 = vpack.c.b16 %v776, %v775
        %v788 = vpack.c.b16 %v778, %v777
        %v789 = vpack.c.b16 %v780, %v779
        %v790 = vpack.c.b16 %v782, %v781
        %799 = vmatprep.subr.bf16.mxu0 0
        %800 = vmatpush1.bf16.msra.mxu0 %v783
        %801 = vmatprep.subr.bf16.mxu0 0
        %802 = vmatpush1.bf16.msra.mxu0 %v784
        %803 = vmatprep.subr.bf16.mxu0 0
        %804 = vmatpush1.bf16.msra.mxu0 %v785
        %805 = vmatprep.subr.bf16.mxu0 0
        %806 = vmatpush1.bf16.msra.mxu0 %v786
        %807 = vmatprep.subr.bf16.mxu0 0
        %808 = vmatpush1.bf16.msra.mxu0 %v787
        %809 = vmatprep.subr.bf16.mxu0 0
        %810 = vmatpush1.bf16.msra.mxu0 %v788
        %811 = vmatprep.subr.bf16.mxu0 0
        %812 = vmatpush1.bf16.msra.mxu0 %v789
        %813 = vmatprep.subr.bf16.mxu0 0
        %814 = vmatpush1.bf16.msra.mxu0 %v790
        %815 = vmatprep.subr.bf16.mxu0 0
        %816 = vmatpush1.bf16.msra.mxu0 0
        %817 = vmatprep.subr.bf16.mxu0 0
        %818 = vmatpush1.bf16.msra.mxu0 0
        %819 = vmatprep.subr.bf16.mxu0 0
        %820 = vmatpush1.bf16.msra.mxu0 0
        %821 = vmatprep.subr.bf16.mxu0 0
        %822 = vmatpush1.bf16.msra.mxu0 0
        %823 = vmatprep.subr.bf16.mxu0 0
        %824 = vmatpush1.bf16.msra.mxu0 0
        %825 = vmatprep.subr.bf16.mxu0 0
        %826 = vmatpush1.bf16.msra.mxu0 0
        %827 = vmatprep.subr.bf16.mxu0 0
        %828 = vmatpush1.bf16.msra.mxu0 0
        %829 = vmatprep.subr.bf16.mxu0 0
        %830 = vmatpush1.bf16.msra.mxu0 0
        %831 = vmatprep.mubr.bf16.mxu0 0
        %832 = vmatmul.mubr.bf16.gmra.mrb[0].mxu0 %v735
        %v833 = vpop.f32.mrb[0].mxu0
        %v834 = vadd.f32 0.0, %v833
        %v835 = vpop.f32.mrb[0].mxu0
        %v836 = vpop.f32.mrb[0].mxu0
        %v837 = vadd.f32 0.0, %v836
        %v838 = vpop.f32.mrb[0].mxu0
        %839 = vmatprep.mubr.bf16.mxu0 0
        %840 = vmatmul.mubr.bf16.gmra.mrb[0].mxu0 %v736
        %v841 = vpop.f32.mrb[0].mxu0
        %v842 = vadd.f32 0.0, %v841
        %v843 = vpop.f32.mrb[0].mxu0
        %v844 = vpop.f32.mrb[0].mxu0
        %v845 = vadd.f32 0.0, %v844
        %v846 = vpop.f32.mrb[0].mxu0
        %847 = vmatprep.mubr.bf16.mxu0 0
        %848 = vmatmul.mubr.bf16.gmra.mrb[0].mxu0 %v737
        %v849 = vpop.f32.mrb[0].mxu0
        %v850 = vadd.f32 0.0, %v849
        %v851 = vpop.f32.mrb[0].mxu0
        %v852 = vpop.f32.mrb[0].mxu0
        %v853 = vadd.f32 0.0, %v852
        %v854 = vpop.f32.mrb[0].mxu0
        %855 = vmatprep.mubr.bf16.mxu0 0
        %856 = vmatmul.mubr.bf16.gmra.mrb[0].mxu0 %v738
        %v857 = vpop.f32.mrb[0].mxu0
        %v858 = vadd.f32 0.0, %v857
        %v859 = vpop.f32.mrb[0].mxu0
        %v860 = vpop.f32.mrb[0].mxu0
        %v861 = vadd.f32 0.0, %v860
        %v862 = vpop.f32.mrb[0].mxu0
        %863 = vmatprep.mubr.bf16.mxu0 0
        %864 = vmatmul.mubr.bf16.gmra.mrb[0].mxu0 %v739
        %v865 = vpop.f32.mrb[0].mxu0
        %v866 = vadd.f32 0.0, %v865
        %v867 = vpop.f32.mrb[0].mxu0
        %v868 = vpop.f32.mrb[0].mxu0
        %v869 = vadd.f32 0.0, %v868
        %v870 = vpop.f32.mrb[0].mxu0
        %871 = vmatprep.mubr.bf16.mxu0 0
        %872 = vmatmul.mubr.bf16.gmra.mrb[0].mxu0 %v740
        %v873 = vpop.f32.mrb[0].mxu0
        %v874 = vadd.f32 0.0, %v873
        %v875 = vpop.f32.mrb[0].mxu0
        %v876 = vpop.f32.mrb[0].mxu0
        %v877 = vadd.f32 0.0, %v876
        %v878 = vpop.f32.mrb[0].mxu0
        %879 = vmatprep.mubr.bf16.mxu0 0
        %880 = vmatmul.mubr.bf16.gmra.mrb[0].mxu0 %v741
        %v881 = vpop.f32.mrb[0].mxu0
        %v882 = vadd.f32 0.0, %v881
        %v883 = vpop.f32.mrb[0].mxu0
        %v884 = vpop.f32.mrb[0].mxu0
        %v885 = vadd.f32 0.0, %v884
        %v886 = vpop.f32.mrb[0].mxu0
        %887 = vmatprep.mubr.bf16.mxu0 0
        %888 = vmatmul.mubr.bf16.gmra.mrb[0].mxu0 %v742
        %v889 = vpop.f32.mrb[0].mxu0
        %v890 = vadd.f32 0.0, %v889
        %v891 = vpop.f32.mrb[0].mxu0
        %v892 = vpop.f32.mrb[0].mxu0
        %v893 = vadd.f32 0.0, %v892
        %v894 = vpop.f32.mrb[0].mxu0
        %895 = vdwg.mxu0
        %v896 = vpack.c.bf16 %v628, %v625
        %v897 = vpack.c.bf16 %v636, %v633
        %v898 = vpack.c.bf16 %v644, %v641
        %v899 = vpack.c.bf16 %v652, %v649
        %v900 = vpack.c.bf16 %v660, %v657
        %v901 = vpack.c.bf16 %v668, %v665
        %v902 = vpack.c.bf16 %v676, %v673
        %v903 = vpack.c.bf16 %v684, %v681
        %v904 = vpack.c.bf16 %v837, %v834
        %v905 = vpack.c.bf16 %v845, %v842
        %v906 = vpack.c.bf16 %v853, %v850
        %v907 = vpack.c.bf16 %v861, %v858
        %v908 = vpack.c.bf16 %v869, %v866
        %v909 = vpack.c.bf16 %v877, %v874
        %v910 = vpack.c.bf16 %v885, %v882
        %v911 = vpack.c.bf16 %v893, %v890
        %v928 = vunpack.c.l.b16 %v357
        %v929 = vunpack.c.l.b16 %v358
        %v930 = vunpack.c.l.b16 %v359
        %v931 = vunpack.c.l.b16 %v360
        %v932 = vunpack.c.l.b16 %v361
        %v933 = vunpack.c.l.b16 %v362
        %v934 = vunpack.c.l.b16 %v363
        %v935 = vunpack.c.l.b16 %v364
        %v936 = vunpack.c.l.b16 %v365
        %v937 = vunpack.c.l.b16 %v366
        %v938 = vunpack.c.l.b16 %v367
        %v939 = vunpack.c.l.b16 %v368
        %v940 = vunpack.c.l.b16 %v369
        %v941 = vunpack.c.l.b16 %v370
        %v942 = vunpack.c.l.b16 %v371
        %v943 = vunpack.c.l.b16 %v372
        %v944 = vpack.c.b16 %v929, %v928
        %v945 = vpack.c.b16 %v931, %v930
        %v946 = vpack.c.b16 %v933, %v932
        %v947 = vpack.c.b16 %v935, %v934
        %v948 = vpack.c.b16 %v937, %v936
        %v949 = vpack.c.b16 %v939, %v938
        %v950 = vpack.c.b16 %v941, %v940
        %v951 = vpack.c.b16 %v943, %v942
        %960 = vmatprep.subr.bf16.mxu0 0
        %961 = vmatpush1.bf16.msra.mxu0 %v944
        %962 = vmatprep.subr.bf16.mxu0 0
        %963 = vmatpush1.bf16.msra.mxu0 %v945
        %964 = vmatprep.subr.bf16.mxu0 0
        %965 = vmatpush1.bf16.msra.mxu0 %v946
        %966 = vmatprep.subr.bf16.mxu0 0
        %967 = vmatpush1.bf16.msra.mxu0 %v947
        %968 = vmatprep.subr.bf16.mxu0 0
        %969 = vmatpush1.bf16.msra.mxu0 %v948
        %970 = vmatprep.subr.bf16.mxu0 0
        %971 = vmatpush1.bf16.msra.mxu0 %v949
        %972 = vmatprep.subr.bf16.mxu0 0
        %973 = vmatpush1.bf16.msra.mxu0 %v950
        %974 = vmatprep.subr.bf16.mxu0 0
        %975 = vmatpush1.bf16.msra.mxu0 %v951
        %976 = vmatprep.subr.bf16.mxu0 0
        %977 = vmatpush1.bf16.msra.mxu0 0
        %978 = vmatprep.subr.bf16.mxu0 0
        %979 = vmatpush1.bf16.msra.mxu0 0
        %980 = vmatprep.subr.bf16.mxu0 0
        %981 = vmatpush1.bf16.msra.mxu0 0
        %982 = vmatprep.subr.bf16.mxu0 0
        %983 = vmatpush1.bf16.msra.mxu0 0
        %984 = vmatprep.subr.bf16.mxu0 0
        %985 = vmatpush1.bf16.msra.mxu0 0
        %986 = vmatprep.subr.bf16.mxu0 0
        %987 = vmatpush1.bf16.msra.mxu0 0
        %988 = vmatprep.subr.bf16.mxu0 0
        %989 = vmatpush1.bf16.msra.mxu0 0
        %990 = vmatprep.subr.bf16.mxu0 0
        %991 = vmatpush1.bf16.msra.mxu0 0
        %992 = vmatprep.mubr.bf16.mxu0 0
        %993 = vmatmul.mubr.bf16.gmra.mrb[0].mxu0 %v904
        %v994 = vpop.f32.mrb[0].mxu0
        %v995 = vadd.f32 0.0, %v994
        %v996 = vpop.f32.mrb[0].mxu0
        %v997 = vpop.f32.mrb[0].mxu0
        %v998 = vadd.f32 0.0, %v997
        %v999 = vpop.f32.mrb[0].mxu0
        %1000 = vmatprep.mubr.bf16.mxu0 0
        %1001 = vmatmul.mubr.bf16.gmra.mrb[0].mxu0 %v905
        %v1002 = vpop.f32.mrb[0].mxu0
        %v1003 = vadd.f32 0.0, %v1002
        %v1004 = vpop.f32.mrb[0].mxu0
        %v1005 = vpop.f32.mrb[0].mxu0
        %v1006 = vadd.f32 0.0, %v1005
        %v1007 = vpop.f32.mrb[0].mxu0
        %1008 = vmatprep.mubr.bf16.mxu0 0
        %1009 = vmatmul.mubr.bf16.gmra.mrb[0].mxu0 %v906
        %v1010 = vpop.f32.mrb[0].mxu0
        %v1011 = vadd.f32 0.0, %v1010
        %v1012 = vpop.f32.mrb[0].mxu0
        %v1013 = vpop.f32.mrb[0].mxu0
        %v1014 = vadd.f32 0.0, %v1013
        %v1015 = vpop.f32.mrb[0].mxu0
        %1016 = vmatprep.mubr.bf16.mxu0 0
        %1017 = vmatmul.mubr.bf16.gmra.mrb[0].mxu0 %v907
        %v1018 = vpop.f32.mrb[0].mxu0
        %v1019 = vadd.f32 0.0, %v1018
        %v1020 = vpop.f32.mrb[0].mxu0
        %v1021 = vpop.f32.mrb[0].mxu0
        %v1022 = vadd.f32 0.0, %v1021
        %v1023 = vpop.f32.mrb[0].mxu0
        %1024 = vmatprep.mubr.bf16.mxu0 0
        %1025 = vmatmul.mubr.bf16.gmra.mrb[0].mxu0 %v908
        %v1026 = vpop.f32.mrb[0].mxu0
        %v1027 = vadd.f32 0.0, %v1026
        %v1028 = vpop.f32.mrb[0].mxu0
        %v1029 = vpop.f32.mrb[0].mxu0
        %v1030 = vadd.f32 0.0, %v1029
        %v1031 = vpop.f32.mrb[0].mxu0
        %1032 = vmatprep.mubr.bf16.mxu0 0
        %1033 = vmatmul.mubr.bf16.gmra.mrb[0].mxu0 %v909
        %v1034 = vpop.f32.mrb[0].mxu0
        %v1035 = vadd.f32 0.0, %v1034
        %v1036 = vpop.f32.mrb[0].mxu0
        %v1037 = vpop.f32.mrb[0].mxu0
        %v1038 = vadd.f32 0.0, %v1037
        %v1039 = vpop.f32.mrb[0].mxu0
        %1040 = vmatprep.mubr.bf16.mxu0 0
        %1041 = vmatmul.mubr.bf16.gmra.mrb[0].mxu0 %v910
        %v1042 = vpop.f32.mrb[0].mxu0
        %v1043 = vadd.f32 0.0, %v1042
        %v1044 = vpop.f32.mrb[0].mxu0
        %v1045 = vpop.f32.mrb[0].mxu0
        %v1046 = vadd.f32 0.0, %v1045
        %v1047 = vpop.f32.mrb[0].mxu0
        %1048 = vmatprep.mubr.bf16.mxu0 0
        %1049 = vmatmul.mubr.bf16.gmra.mrb[0].mxu0 %v911
        %v1050 = vpop.f32.mrb[0].mxu0
        %v1051 = vadd.f32 0.0, %v1050
        %v1052 = vpop.f32.mrb[0].mxu0
        %v1053 = vpop.f32.mrb[0].mxu0
        %v1054 = vadd.f32 0.0, %v1053
        %v1055 = vpop.f32.mrb[0].mxu0
        %1056 = vdwg.mxu0
        %v1073 = vunpack.c.l.b16 %v341
        %v1074 = vunpack.c.l.b16 %v342
        %v1075 = vunpack.c.l.b16 %v343
        %v1076 = vunpack.c.l.b16 %v344
        %v1077 = vunpack.c.l.b16 %v345
        %v1078 = vunpack.c.l.b16 %v346
        %v1079 = vunpack.c.l.b16 %v347
        %v1080 = vunpack.c.l.b16 %v348
        %v1081 = vunpack.c.l.b16 %v349
        %v1082 = vunpack.c.l.b16 %v350
        %v1083 = vunpack.c.l.b16 %v351
        %v1084 = vunpack.c.l.b16 %v352
        %v1085 = vunpack.c.l.b16 %v353
        %v1086 = vunpack.c.l.b16 %v354
        %v1087 = vunpack.c.l.b16 %v355
        %v1088 = vunpack.c.l.b16 %v356
        %v1089 = vpack.c.b16 %v1074, %v1073
        %v1090 = vpack.c.b16 %v1076, %v1075
        %v1091 = vpack.c.b16 %v1078, %v1077
        %v1092 = vpack.c.b16 %v1080, %v1079
        %v1093 = vpack.c.b16 %v1082, %v1081
        %v1094 = vpack.c.b16 %v1084, %v1083
        %v1095 = vpack.c.b16 %v1086, %v1085
        %v1096 = vpack.c.b16 %v1088, %v1087
        %1105 = vmatprep.subr.bf16.mxu0 0
        %1106 = vmatpush1.bf16.msra.mxu0 %v1089
        %1107 = vmatprep.subr.bf16.mxu0 0
        %1108 = vmatpush1.bf16.msra.mxu0 %v1090
        %1109 = vmatprep.subr.bf16.mxu0 0
        %1110 = vmatpush1.bf16.msra.mxu0 %v1091
        %1111 = vmatprep.subr.bf16.mxu0 0
        %1112 = vmatpush1.bf16.msra.mxu0 %v1092
        %1113 = vmatprep.subr.bf16.mxu0 0
        %1114 = vmatpush1.bf16.msra.mxu0 %v1093
        %1115 = vmatprep.subr.bf16.mxu0 0
        %1116 = vmatpush1.bf16.msra.mxu0 %v1094
        %1117 = vmatprep.subr.bf16.mxu0 0
        %1118 = vmatpush1.bf16.msra.mxu0 %v1095
        %1119 = vmatprep.subr.bf16.mxu0 0
        %1120 = vmatpush1.bf16.msra.mxu0 %v1096
        %1121 = vmatprep.subr.bf16.mxu0 0
        %1122 = vmatpush1.bf16.msra.mxu0 0
        %1123 = vmatprep.subr.bf16.mxu0 0
        %1124 = vmatpush1.bf16.msra.mxu0 0
        %1125 = vmatprep.subr.bf16.mxu0 0
        %1126 = vmatpush1.bf16.msra.mxu0 0
        %1127 = vmatprep.subr.bf16.mxu0 0
        %1128 = vmatpush1.bf16.msra.mxu0 0
        %1129 = vmatprep.subr.bf16.mxu0 0
        %1130 = vmatpush1.bf16.msra.mxu0 0
        %1131 = vmatprep.subr.bf16.mxu0 0
        %1132 = vmatpush1.bf16.msra.mxu0 0
        %1133 = vmatprep.subr.bf16.mxu0 0
        %1134 = vmatpush1.bf16.msra.mxu0 0
        %1135 = vmatprep.subr.bf16.mxu0 0
        %1136 = vmatpush1.bf16.msra.mxu0 0
        %1137 = vmatprep.mubr.bf16.mxu0 0
        %1138 = vmatmul.mubr.bf16.gmra.mrb[0].mxu0 %v896
        %v1139 = vpop.f32.mrb[0].mxu0
        %v1140 = vadd.f32 %v995, %v1139
        %v1141 = vpop.f32.mrb[0].mxu0
        %v1142 = vpop.f32.mrb[0].mxu0
        %v1143 = vadd.f32 %v998, %v1142
        %v1144 = vpop.f32.mrb[0].mxu0
        %1145 = vmatprep.mubr.bf16.mxu0 0
        %1146 = vmatmul.mubr.bf16.gmra.mrb[0].mxu0 %v897
        %v1147 = vpop.f32.mrb[0].mxu0
        %v1148 = vadd.f32 %v1003, %v1147
        %v1149 = vpop.f32.mrb[0].mxu0
        %v1150 = vpop.f32.mrb[0].mxu0
        %v1151 = vadd.f32 %v1006, %v1150
        %v1152 = vpop.f32.mrb[0].mxu0
        %1153 = vmatprep.mubr.bf16.mxu0 0
        %1154 = vmatmul.mubr.bf16.gmra.mrb[0].mxu0 %v898
        %v1155 = vpop.f32.mrb[0].mxu0
        %v1156 = vadd.f32 %v1011, %v1155
        %v1157 = vpop.f32.mrb[0].mxu0
        %v1158 = vpop.f32.mrb[0].mxu0
        %v1159 = vadd.f32 %v1014, %v1158
        %v1160 = vpop.f32.mrb[0].mxu0
        %1161 = vmatprep.mubr.bf16.mxu0 0
        %1162 = vmatmul.mubr.bf16.gmra.mrb[0].mxu0 %v899
        %v1163 = vpop.f32.mrb[0].mxu0
        %v1164 = vadd.f32 %v1019, %v1163
        %v1165 = vpop.f32.mrb[0].mxu0
        %v1166 = vpop.f32.mrb[0].mxu0
        %v1167 = vadd.f32 %v1022, %v1166
        %v1168 = vpop.f32.mrb[0].mxu0
        %1169 = vmatprep.mubr.bf16.mxu0 0
        %1170 = vmatmul.mubr.bf16.gmra.mrb[0].mxu0 %v900
        %v1171 = vpop.f32.mrb[0].mxu0
        %v1172 = vadd.f32 %v1027, %v1171
        %v1173 = vpop.f32.mrb[0].mxu0
        %v1174 = vpop.f32.mrb[0].mxu0
        %v1175 = vadd.f32 %v1030, %v1174
        %v1176 = vpop.f32.mrb[0].mxu0
        %1177 = vmatprep.mubr.bf16.mxu0 0
        %1178 = vmatmul.mubr.bf16.gmra.mrb[0].mxu0 %v901
        %v1179 = vpop.f32.mrb[0].mxu0
        %v1180 = vadd.f32 %v1035, %v1179
        %v1181 = vpop.f32.mrb[0].mxu0
        %v1182 = vpop.f32.mrb[0].mxu0
        %v1183 = vadd.f32 %v1038, %v1182
        %v1184 = vpop.f32.mrb[0].mxu0
        %1185 = vmatprep.mubr.bf16.mxu0 0
        %1186 = vmatmul.mubr.bf16.gmra.mrb[0].mxu0 %v902
        %v1187 = vpop.f32.mrb[0].mxu0
        %v1188 = vadd.f32 %v1043, %v1187
        %v1189 = vpop.f32.mrb[0].mxu0
        %v1190 = vpop.f32.mrb[0].mxu0
        %v1191 = vadd.f32 %v1046, %v1190
        %v1192 = vpop.f32.mrb[0].mxu0
        %1193 = vmatprep.mubr.bf16.mxu0 0
        %1194 = vmatmul.mubr.bf16.gmra.mrb[0].mxu0 %v903
        %v1195 = vpop.f32.mrb[0].mxu0
        %v1196 = vadd.f32 %v1051, %v1195
        %v1197 = vpop.f32.mrb[0].mxu0
        %v1198 = vpop.f32.mrb[0].mxu0
        %v1199 = vadd.f32 %v1054, %v1198
        %v1200 = vpop.f32.mrb[0].mxu0
        %1201 = vdwg.mxu0
        %1202 = vst [vmem:[#allocation10] sm:$0xff] %v1140
        %1203 = vst [vmem:[#allocation10 + $0x8] sm:$0xff] %v1143
        %1204 = vst [vmem:[#allocation10 + $0x10] sm:$0xff] %v1148
        %1205 = vst [vmem:[#allocation10 + $0x18] sm:$0xff] %v1151
        %1206 = vst [vmem:[#allocation10 + $0x20] sm:$0xff] %v1156
        %1207 = vst [vmem:[#allocation10 + $0x28] sm:$0xff] %v1159
        %1208 = vst [vmem:[#allocation10 + $0x30] sm:$0xff] %v1164
        %1209 = vst [vmem:[#allocation10 + $0x38] sm:$0xff] %v1167
        %1210 = vst [vmem:[#allocation10 + $0x40] sm:$0xff] %v1172
        %1211 = vst [vmem:[#allocation10 + $0x48] sm:$0xff] %v1175
        %1212 = vst [vmem:[#allocation10 + $0x50] sm:$0xff] %v1180
        %1213 = vst [vmem:[#allocation10 + $0x58] sm:$0xff] %v1183
        %1214 = vst [vmem:[#allocation10 + $0x60] sm:$0xff] %v1188
        %1215 = vst [vmem:[#allocation10 + $0x68] sm:$0xff] %v1191
        %1216 = vst [vmem:[#allocation10 + $0x70] sm:$0xff] %v1196
        %1217 = vst [vmem:[#allocation10 + $0x78] sm:$0xff] %v1199
        // Predicated region
        $region57: #{tpu_custom_call.1} parent=35 // pred_check
          %p1218 = pneg %p123
        $region58: #{tpu_custom_call.1} parent=35 // pred_check_branch
          %1220 = sbr.rel (%p1218) target = $region60
        $region59: #{tpu_custom_call.1} parent=35 // pred_region
          %s1222 = ssub.s32 2048, 2048
          %1223 = vsyncadd [#allocation4], %s1222
          %s1224 = sshll.u32 [#allocation10], 4
          %s1225 = int_to_ptr.vmem [resolvable:$true] %s1224
          %1230 = dma.vmem_to_hbm [thread:$0]  %s1225, 2048, %s4, [#allocation4], 128, 128, 8
        $region60: #{tpu_custom_call.1} parent=35 // pred_fallthru
          _
        // Predicated region
        $region61: #{tpu_custom_call.1} parent=35 // pred_check
          %p1231 = pneg %p123
        $region62: #{tpu_custom_call.1} parent=35 // pred_check_branch
          %1233 = sbr.rel (%p1231) target = $region64
        $region63: #{tpu_custom_call.1} parent=35 // pred_region
          %1234 = dma.done [#allocation4], 2048
        $region64: #{tpu_custom_call.1} parent=35 // pred_fallthru
          _
      $region36: #{tpu_custom_call.1} parent=5 // pred_fallthru
        _
      %p1235 = scmp.le.s32.totalorder 2, %s16
      // Predicated region
      $region65: #{tpu_custom_call.1} parent=5 // pred_check
        %p1236 = pneg %p1235
      $region66: #{tpu_custom_call.1} parent=5 // pred_check_branch
        %1238 = sbr.rel (%p1236) target = $region68
      $region67: #{tpu_custom_call.1} parent=5 // pred_region
        %s1239 = ssub.s32 %s16, 2
      $region68: #{tpu_custom_call.1} parent=5 // pred_fallthru
        _
    $region6: #{tpu_custom_call.1} parent=1 // loop_footer
      %s20 = sadd.s32 1, %s16
    $region7: #{tpu_custom_call.1} parent=1 // loop_footer_branch
      %15 = sbr.rel target = $region3
    $region8: #{tpu_custom_call.1} parent=1 // loop_exit
      _
    %1240 = vsyncpa [#allocation3], 1
    %s1241 = scalar_lea.sflag [#allocation3], 1
    %1242 = vsyncpa %s1241, 1
    %1243 = vsyncpa [#allocation6], 1
    %1244 = vsyncpa [#allocation9], 1
    %s1245 = scalar_lea.sflag [#allocation9], 1
    %1246 = vsyncpa %s1245, 1
    %1247 = vsyncpa [#allocation4], 1
    %s1248 = scalar_lea.sflag [#allocation4], 1
    %1249 = vsyncpa %s1248, 1

</llo_original>
